<compile_context>
chip_gen: v7x
topology: tpu7x:2x2x1
jax: 0.10.0
libtpu: 0.0.40
codegen_flags: <defaults>
</compile_context>

<pallas_src>
import functools

import jax
import jax.numpy as jnp
from jax import lax
from jax.experimental import pallas as pl
from jax.experimental.pallas import tpu as pltpu

EPS = 1e-12  # F.normalize default eps


def _round_up(x: int, m: int) -> int:
    return (x + m - 1) // m * m


def _round_down(x: int, m: int) -> int:
    return (x // m) * m


def _stellar_fc_kernel(x_ref, w_ref, cs_ref, out_ref, *, compute_dtype):
    # x_ref: (tn, D) f32 streamed tile; w_ref: (D, Cp) resident; cs_ref: (1, Cp)
    # precomputed temperature/||w_col||; out_ref: (tn, Cp) f32.
    x = x_ref[...]
    # Row L2 norm in f32 (VPU + XLU + EUP); normalization is applied in the
    # epilogue so no normalized copy of x is materialized before the MXU.
    row_ssq = jnp.sum(x * x, axis=1, keepdims=True)                 # (tn, 1)
    row_scale = lax.rsqrt(jnp.maximum(row_ssq, EPS * EPS))          # == 1/max(||x||, eps)
    # MXU contraction on raw (cast) operands, f32 accumulate.
    acc = jnp.dot(x.astype(compute_dtype), w_ref[...],
                  preferred_element_type=jnp.float32)               # (tn, Cp)
    # Epilogue: per-row 1/||x|| and per-column temperature/||w_col||.
    out_ref[...] = (acc * row_scale * cs_ref[...]).astype(out_ref.dtype)


def vanilla_stellar_fc_net(x, weight, temperature, *, tile_n: int = 1024,
                           use_bf16_matmul: bool = True):
    """Pallas forward of VanillaStellarFCNet. x: (N, D), weight: (D, C)."""
    N, D = x.shape
    D2, C = weight.shape
    assert D == D2, f"feature dim mismatch: {D} vs {D2}"

    x = x.astype(jnp.float32)
    w32 = weight.astype(jnp.float32)

    # Pad only the class axis to lane width (keeps unmasked vst + full MXU lanes).
    c_pad = _round_up(C, 128)

    # Hoisted once: per-column scale = temperature / max(||w_col||, eps).
    col_ssq = jnp.sum(w32 * w32, axis=0, keepdims=True)             # (1, C)
    col_scale = float(temperature) * lax.rsqrt(jnp.maximum(col_ssq, EPS * EPS))
    col_scale = jnp.pad(col_scale, ((0, 0), (0, c_pad - C)))        # (1, Cp)

    compute_dtype = jnp.bfloat16 if use_bf16_matmul else jnp.float32
    w_in = jnp.pad(w32, ((0, 0), (0, c_pad - C))).astype(compute_dtype)

    # Generation-aware VMEM budget (v5e/v6e: 128 MiB, v7x: 64 MiB per TC).
    try:
        vmem_cap = int(pltpu.get_tpu_info().vmem_capacity_bytes)
    except Exception:  # pragma: no cover - conservative fallback
        vmem_cap = 64 << 20
    budget = int(vmem_cap * 3 // 4)

    wbytes = jnp.dtype(compute_dtype).itemsize
    w_foot = 2 * D * c_pad * wbytes                 # W may be double-buffered
    fixed = w_foot + 2 * c_pad * 4 + (2 << 20)      # + col_scale bufs + slack
    per_row = 2 * D * 4 + 2 * c_pad * 4             # x (2 bufs, f32) + out (2 bufs, f32)
    tn_cap = max(8, _round_down(max(budget - fixed, 0) // per_row, 8))
    tn = max(8, min(_round_down(tile_n, 8) or 8, _round_up(N, 8), tn_cap, 1024))

    grid = (pl.cdiv(N, tn),)
    vmem_limit = int(min(max(w_foot + tn * per_row + (2 << 20), 16 << 20), budget))

    out = pl.pallas_call(
        functools.partial(_stellar_fc_kernel, compute_dtype=compute_dtype),
        out_shape=jax.ShapeDtypeStruct((N, c_pad), jnp.float32),
        grid=grid,
        in_specs=[
            pl.BlockSpec((tn, D), lambda i: (i, 0)),       # x: streamed, unpadded
            pl.BlockSpec((D, c_pad), lambda i: (0, 0)),    # W: resident block
            pl.BlockSpec((1, c_pad), lambda i: (0, 0)),    # col scale: resident
        ],
        out_specs=pl.BlockSpec((tn, c_pad), lambda i: (i, 0)),
        compiler_params=pltpu.CompilerParams(
            dimension_semantics=("parallel",),
            vmem_limit_bytes=vmem_limit,
        ),
        cost_estimate=pl.CostEstimate(
            flops=2 * N * D * c_pad,
            transcendentals=N,
            bytes_accessed=(N * D * 4 + D * c_pad * wbytes
                            + c_pad * 4 + N * c_pad * 4),
        ),
    )(x, w_in, col_scale)

    return out if c_pad == C else out[:, :C]


def init_stellar_weight(key, in_features, out_features):
    """Replica of: uniform_(-1,1).renorm_(2, 1, 1e-5).mul_(1e5) (unit-norm columns)."""
    w = jax.random.uniform(key, (in_features, out_features),
                           dtype=jnp.float32, minval=-1.0, maxval=1.0)
    col_norm = jnp.sqrt(jnp.sum(w * w, axis=0, keepdims=True))
    scale = jnp.where(col_norm > 1e-5, 1e-5 / col_norm, 1.0)
    return w * scale * 1e5


def reference_forward(x, weight, temperature):
    """Pure-JAX reference mirroring the PyTorch forward."""
    x_n = x / jnp.maximum(jnp.sqrt(jnp.sum(x * x, axis=1, keepdims=True)), EPS)
    w_n = weight / jnp.maximum(
        jnp.sqrt(jnp.sum(weight * weight, axis=0, keepdims=True)), EPS)
    return temperature * (x_n @ w_n)


if __name__ == "__main__":
    key = jax.random.PRNGKey(0)
    k_x, k_w, k_x2 = jax.random.split(key, 3)

    # Small shapes matching the module (batch N, input_dim D, num_classes C).
    N, INPUT_DIM, NUM_CLASSES = 8, 32, 8
    TEMPERATURE = 10.0

    x = jax.random.normal(k_x, (N, INPUT_DIM), dtype=jnp.float32)
    weight = init_stellar_weight(k_w, INPUT_DIM, NUM_CLASSES)
    ref = reference_forward(x, weight, TEMPERATURE)

    # Exact-f32 MXU path: matches F.normalize semantics to 1e-4.
    out_f32 = jax.block_until_ready(
        vanilla_stellar_fc_net(x, weight, TEMPERATURE, use_bf16_matmul=False))
    assert out_f32.shape == (N, NUM_CLASSES)
    assert jnp.allclose(out_f32, ref, atol=1e-4, rtol=1e-4), "mismatch (f32 path)"

    # Default bf16-MXU path (2-4x matmul rate); looser tolerance for bf16 operands.
    out_bf16 = jax.block_until_ready(vanilla_stellar_fc_net(x, weight, TEMPERATURE))
    assert out_bf16.shape == (N, NUM_CLASSES)
    assert jnp.allclose(out_bf16, ref, atol=1e-1, rtol=5e-2), "mismatch (bf16 path)"

    # Multi-tile grid + ragged last batch block (no wrapper-side padding of x).
    N2 = 300
    x2 = jax.random.normal(k_x2, (N2, INPUT_DIM), dtype=jnp.float32)
    ref2 = reference_forward(x2, weight, TEMPERATURE)

    out2 = jax.block_until_ready(
        vanilla_stellar_fc_net(x2, weight, TEMPERATURE, tile_n=128,
                               use_bf16_matmul=False))
    assert out2.shape == (N2, NUM_CLASSES)
    assert jnp.allclose(out2, ref2, atol=1e-4, rtol=1e-4), "mismatch (tiled f32)"

    out2b = jax.block_until_ready(
        vanilla_stellar_fc_net(x2, weight, TEMPERATURE, tile_n=128))
    assert jnp.allclose(out2b, ref2, atol=1e-1, rtol=5e-2), "mismatch (tiled bf16)"

    print("KERNEL_OK")
</pallas_src>

<mosaic_0001>
module attributes {stable_mosaic.version = 11 : i64} {
  func.func @_stellar_fc_kernel(%arg0: i32, %arg1: memref<8x32xf32, #tpu.memory_space<vmem>>, %arg2: memref<32x128xf32, #tpu.memory_space<vmem>>, %arg3: memref<1x128xf32, #tpu.memory_space<vmem>>, %arg4: memref<8x128xf32, #tpu.memory_space<vmem>>) attributes {dimension_semantics = [#tpu.dimension_semantics<parallel>], iteration_bounds = array<i64: 1>, scalar_prefetch = 0 : i64, scratch_operands = 0 : i64, tpu.core_type = #tpu.core_type<tc>, window_params = [{transform_indices = @transform_0, window_bounds = array<i64: 8, 32>}, {pipeline_mode = #tpu.pipeline_mode<synchronous>, transform_indices = @transform_1, window_bounds = array<i64: 32, 128>}, {pipeline_mode = #tpu.pipeline_mode<synchronous>, transform_indices = @transform_2, window_bounds = array<i64: 1, 128>}, {transform_indices = @transform_3, window_bounds = array<i64: 8, 128>}]} {
    %c0 = arith.constant 0 : index
    %c0_0 = arith.constant 0 : index
    %0 = vector.load %arg1[%c0, %c0_0] : memref<8x32xf32, #tpu.memory_space<vmem>>, vector<8x32xf32>
    %1 = arith.mulf %0, %0 : vector<8x32xf32>
    %cst = arith.constant dense<0.000000e+00> : vector<8xf32>
    %2 = vector.multi_reduction <add>, %1, %cst [1] : vector<8x32xf32> to vector<8xf32>
    %3 = vector.shape_cast %2 : vector<8xf32> to vector<8x1xf32>
    %cst_1 = arith.constant 1.000000e-24 : f32
    %4 = vector.broadcast %cst_1 : f32 to vector<8x1xf32>
    %5 = arith.maximumf %3, %4 : vector<8x1xf32>
    %6 = math.rsqrt %5 : vector<8x1xf32>
    %c0_2 = arith.constant 0 : index
    %c0_3 = arith.constant 0 : index
    %7 = vector.load %arg2[%c0_2, %c0_3] : memref<32x128xf32, #tpu.memory_space<vmem>>, vector<32x128xf32>
    %cst_4 = arith.constant dense<0.000000e+00> : vector<8x128xf32>
    %8 = tpu.matmul %0, %7, %cst_4 {dimension_numbers = #tpu.dot_dimension_numbers<[1], [0], [0], [1], [0, 0, 1, 1], [], []>} : vector<8x32xf32>, vector<32x128xf32>, vector<8x128xf32> -> vector<8x128xf32>
    %9 = vector.broadcast %6 : vector<8x1xf32> to vector<8x128xf32>
    %10 = arith.mulf %8, %9 : vector<8x128xf32>
    %c0_5 = arith.constant 0 : index
    %c0_6 = arith.constant 0 : index
    %11 = vector.load %arg3[%c0_5, %c0_6] : memref<1x128xf32, #tpu.memory_space<vmem>>, vector<1x128xf32>
    %12 = vector.broadcast %11 : vector<1x128xf32> to vector<8x128xf32>
    %13 = arith.mulf %10, %12 : vector<8x128xf32>
    %c0_7 = arith.constant 0 : index
    %c0_8 = arith.constant 0 : index
    %14 = vector.load %arg4[%c0_7, %c0_8] : memref<8x128xf32, #tpu.memory_space<vmem>>, vector<8x128xf32>
    tpu.vector_store %arg4[%c0_7, %c0_8], %13 {strides = array<i32>} : memref<8x128xf32, #tpu.memory_space<vmem>>, vector<8x128xf32>,
    return
  }
  func.func @transform_0(%arg0: i32) -> (i32, i32) {
    %c0_i32 = arith.constant 0 : i32
    %c0_i32_0 = arith.constant 0 : i32
    return %arg0, %c0_i32 : i32, i32
  }
  func.func @transform_1(%arg0: i32) -> (i32, i32) {
    %c0_i32 = arith.constant 0 : i32
    %c0_i32_0 = arith.constant 0 : i32
    %c0_i32_1 = arith.constant 0 : i32
    return %c0_i32, %c0_i32_0 : i32, i32
  }
  func.func @transform_2(%arg0: i32) -> (i32, i32) {
    %c0_i32 = arith.constant 0 : i32
    %c0_i32_0 = arith.constant 0 : i32
    %c0_i32_1 = arith.constant 0 : i32
    return %c0_i32, %c0_i32_0 : i32, i32
  }
  func.func @transform_3(%arg0: i32) -> (i32, i32) {
    %c0_i32 = arith.constant 0 : i32
    %c0_i32_0 = arith.constant 0 : i32
    return %arg0, %c0_i32 : i32, i32
  }
}

</mosaic_0001>

<llo_original>
// kernel: tpu_custom_call.1
$region0: #{tpu_custom_call.1}
  #allocation0 [shape = 'u32[]', space=smem, size = 0x4, offset = 0x4, fixed_abs, tag = 'smem constant byte address 0x4 - core index']
  #allocation1 [shape = 'u32[144,128]{1,0:T(1,128)}', space=vmem, size = 0x12000, scoped, tag = 'internal scratch']
  %s0 = inlined_call_operand.hbm [shape: f32[8,32], index: 0, kind: input, shape index: {}]
  %s1 = inlined_call_operand.hbm [shape: f32[32,128], index: 1, kind: input, shape index: {}]
  %s2 = inlined_call_operand.vmem [shape: f32[1,128], index: 2, kind: input, shape index: {}]
  %s3 = inlined_call_operand.hbm [shape: f32[8,128], index: 3, kind: output, shape index: {}]
  %s4 = sld [smem:[#allocation0]]
  $region30: #{tpu_custom_call.1} parent=0
    _
  %s6 = ssub.s32 1, %s4
  %s7 = scalar_select 0, %s6, %s4
  $region1: #{tpu_custom_call.1} parent=0
    #allocation2 [shape = 'u8[4096]{0}', space=vmem, size = 0x1000, scoped, tag = 'input window, operand 0, single buffered']
    #allocation3 [shape = 's32[1]{0}', space=sflag, size = 0x4, scoped, tag = 'scoped memory for tpu_custom_call.1']
    #allocation4 [shape = 's32[1]{0}', space=sflag, size = 0x4, scoped, tag = 'scoped memory for tpu_custom_call.1']
    #allocation5 [shape = 'u8[16384]{0}', space=vmem, size = 0x4000, scoped, tag = 'input window, operand 1, single buffered']
    #allocation6 [shape = 's32[1]{0}', space=sflag, size = 0x4, scoped, tag = 'scoped memory for tpu_custom_call.1']
    #allocation7 [shape = 'u8[4096]{0}', space=vmem, size = 0x1000, scoped, tag = 'output window, operand 0, single buffered']
    %8 = vsyncpa [#allocation3], 0
    %9 = vsyncpa [#allocation6], 0
    %10 = vsyncpa [#allocation4], 0
    // Predicated region
    $region2: #{tpu_custom_call.1} parent=1 // pred_check
      _
    $region3: #{tpu_custom_call.1} parent=1 // pred_check_branch
      %12 = sbr.rel (0) target = $region5
    $region4: #{tpu_custom_call.1} parent=1 // pred_region
      %s14 = ssub.s32 128, 128
      %15 = vsyncadd [#allocation3], %s14
      %s17 = sshll.u32 [#allocation2], 4
      %s18 = int_to_ptr.vmem [resolvable:$true] %s17
      %20 = dma.hbm_to_vmem [thread:$0]  %s0, 128, %s18, [#allocation3]
    $region5: #{tpu_custom_call.1} parent=1 // pred_fallthru
      _
    // Predicated region
    $region6: #{tpu_custom_call.1} parent=1 // pred_check
      _
    $region7: #{tpu_custom_call.1} parent=1 // pred_check_branch
      %22 = sbr.rel (0) target = $region9
    $region8: #{tpu_custom_call.1} parent=1 // pred_region
      %s24 = ssub.s32 512, 512
      %25 = vsyncadd [#allocation6], %s24
      %s26 = sshll.u32 [#allocation5], 4
      %s27 = int_to_ptr.vmem [resolvable:$true] %s26
      %32 = dma.hbm_to_vmem [thread:$0]  %s1, 512, %s27, [#allocation6], 128, 128, 8
    $region9: #{tpu_custom_call.1} parent=1 // pred_fallthru
      _
    // Predicated region
    $region10: #{tpu_custom_call.1} parent=1 // pred_check
      _
    $region11: #{tpu_custom_call.1} parent=1 // pred_check_branch
      %34 = sbr.rel (0) target = $region13
    $region12: #{tpu_custom_call.1} parent=1 // pred_region
      _
    $region13: #{tpu_custom_call.1} parent=1 // pred_fallthru
      _
    // Predicated region
    $region14: #{tpu_custom_call.1} parent=1 // pred_check
      _
    $region15: #{tpu_custom_call.1} parent=1 // pred_check_branch
      %36 = sbr.rel (0) target = $region17
    $region16: #{tpu_custom_call.1} parent=1 // pred_region
      %37 = dma.done [#allocation3], 128
    $region17: #{tpu_custom_call.1} parent=1 // pred_fallthru
      _
    // Predicated region
    $region18: #{tpu_custom_call.1} parent=1 // pred_check
      _
    $region19: #{tpu_custom_call.1} parent=1 // pred_check_branch
      %39 = sbr.rel (0) target = $region21
    $region20: #{tpu_custom_call.1} parent=1 // pred_region
      %40 = dma.done [#allocation6], 512
    $region21: #{tpu_custom_call.1} parent=1 // pred_fallthru
      _
    %v41 = vld [vmem:[#allocation2] sm:$0xff]
    %v42 = vmul.f32 %v41, %v41
    %vm43 = vcmask 261120
    %v44 = vsel %vm43, %v42, 0.0
    %45 = vadd.xlane.f32.xlu0 %v44
    %v46 = vpop.xlane.xlu0 %45
    %v47 = vmax.f32 %v46, 1e-24
    %v48 = vrsqrt.pop %v47
    %v49 = vld [vmem:[#allocation5] sm:$0xff]
    %v50 = vld [vmem:[#allocation5 + $0x8] sm:$0xff]
    %v51 = vld [vmem:[#allocation5 + $0x10] sm:$0xff]
    %v52 = vld [vmem:[#allocation5 + $0x18] sm:$0xff]
    %v54 = vsel %vm43, %v41, 0
    %56 = vmatprep.subr.mxu0 0.0
    %57 = vmatpush1.msra.mxu0 %v49
    %58 = vmatprep.subr.mxu0 0.0
    %59 = vmatpush1.msra.mxu0 %v50
    %60 = vmatprep.subr.mxu0 0.0
    %61 = vmatpush1.msra.mxu0 %v51
    %62 = vmatprep.subr.mxu0 0.0
    %63 = vmatpush1.msra.mxu0 %v52
    %64 = vmatprep.subr.mxu0 0.0
    %65 = vmatpush1.msra.mxu0 0.0
    %66 = vmatprep.subr.mxu0 0.0
    %67 = vmatpush1.msra.mxu0 0.0
    %68 = vmatprep.subr.mxu0 0.0
    %69 = vmatpush1.msra.mxu0 0.0
    %70 = vmatprep.subr.mxu0 0.0
    %71 = vmatpush1.msra.mxu0 0.0
    %72 = vmatprep.subr.mxu0 0.0
    %73 = vmatpush1.msra.mxu0 0.0
    %74 = vmatprep.subr.mxu0 0.0
    %75 = vmatpush1.msra.mxu0 0.0
    %76 = vmatprep.subr.mxu0 0.0
    %77 = vmatpush1.msra.mxu0 0.0
    %78 = vmatprep.subr.mxu0 0.0
    %79 = vmatpush1.msra.mxu0 0.0
    %80 = vmatprep.subr.mxu0 0.0
    %81 = vmatpush1.msra.mxu0 0.0
    %82 = vmatprep.subr.mxu0 0.0
    %83 = vmatpush1.msra.mxu0 0.0
    %84 = vmatprep.subr.mxu0 0.0
    %85 = vmatpush1.msra.mxu0 0.0
    %86 = vmatprep.subr.mxu0 0.0
    %87 = vmatpush1.msra.mxu0 0.0
    %88 = vmatprep.subr.mxu0 0.0
    %89 = vmatpush1.msra.mxu0 0.0
    %90 = vmatprep.subr.mxu0 0.0
    %91 = vmatpush1.msra.mxu0 0.0
    %92 = vmatprep.subr.mxu0 0.0
    %93 = vmatpush1.msra.mxu0 0.0
    %94 = vmatprep.subr.mxu0 0.0
    %95 = vmatpush1.msra.mxu0 0.0
    %96 = vmatprep.subr.mxu0 0.0
    %97 = vmatpush1.msra.mxu0 0.0
    %98 = vmatprep.subr.mxu0 0.0
    %99 = vmatpush1.msra.mxu0 0.0
    %100 = vmatprep.subr.mxu0 0.0
    %101 = vmatpush1.msra.mxu0 0.0
    %102 = vmatprep.subr.mxu0 0.0
    %103 = vmatpush1.msra.mxu0 0.0
    %104 = vmatprep.subr.mxu0 0.0
    %105 = vmatpush1.msra.mxu0 0.0
    %106 = vmatprep.subr.mxu0 0.0
    %107 = vmatpush1.msra.mxu0 0.0
    %108 = vmatprep.subr.mxu0 0.0
    %109 = vmatpush1.msra.mxu0 0.0
    %110 = vmatprep.subr.mxu0 0.0
    %111 = vmatpush1.msra.mxu0 0.0
    %112 = vmatprep.subr.mxu0 0.0
    %113 = vmatpush1.msra.mxu0 0.0
    %114 = vmatprep.subr.mxu0 0.0
    %115 = vmatpush1.msra.mxu0 0.0
    %116 = vmatprep.subr.mxu0 0.0
    %117 = vmatpush1.msra.mxu0 0.0
    %118 = vmatprep.subr.mxu0 0.0
    %119 = vmatpush1.msra.mxu0 0.0
    %120 = vmatprep.mubr.f32.mxu0 0.0
    %121 = vmatmul.mubr.f32.gmra.mrb[0].mxu0 %v54
    %v122 = vpop.f32.mrb[0].mxu0
    %v123 = vadd.f32 0.0, %v122
    %v124 = vpop.f32.mrb[0].mxu0
    %125 = vdwg.mxu0
    %v126 = vmul.f32 %v123, %v48
    %v127 = vld [vmem:[%s2] sm:$0x1]
    %v129 = vlaneseq
    %v130 = vshrl.u32 %v129, 7
    %v131 = vsub.s32 0, %v130
    %v132 = vrot.slane %v127, %v131
    %v134 = vmul.f32 %v126, %v132
    %135 = vst [vmem:[#allocation7] sm:$0xff] %v134
    // Predicated region
    $region22: #{tpu_custom_call.1} parent=1 // pred_check
      _
    $region23: #{tpu_custom_call.1} parent=1 // pred_check_branch
      %137 = sbr.rel (0) target = $region25
    $region24: #{tpu_custom_call.1} parent=1 // pred_region
      %s139 = ssub.s32 128, 128
      %140 = vsyncadd [#allocation4], %s139
      %s142 = sshll.u32 [#allocation7], 4
      %s143 = int_to_ptr.vmem [resolvable:$true] %s142
      %145 = dma.vmem_to_hbm [thread:$0]  %s143, 128, %s3, [#allocation4]
    $region25: #{tpu_custom_call.1} parent=1 // pred_fallthru
      _
    // Predicated region
    $region26: #{tpu_custom_call.1} parent=1 // pred_check
      _
    $region27: #{tpu_custom_call.1} parent=1 // pred_check_branch
      %147 = sbr.rel (0) target = $region29
    $region28: #{tpu_custom_call.1} parent=1 // pred_region
      %148 = dma.done [#allocation4], 128
    $region29: #{tpu_custom_call.1} parent=1 // pred_fallthru
      _
    %149 = vsyncpa [#allocation3], 1
    %150 = vsyncpa [#allocation6], 1
    %151 = vsyncpa [#allocation4], 1

</llo_original>
